<compile_context>
chip_gen: v6e
topology: v6e:2x2x1
jax: 0.10.0
libtpu: 0.0.40
codegen_flags: <defaults>
</compile_context>

<pallas_src>
import math
import functools

import jax
import jax.numpy as jnp
from jax.experimental import pallas as pl
from jax.experimental.pallas import tpu as pltpu


def _add_margin_kernel(x_ref, w_ref, invw_ref, invx_ref, label_ref, o_ref, *,
                       scale, margin, block_n):
    """One grid step: (B, D) x (TN, D)^T -> margin-adjusted (B, TN) logits."""
    w = w_ref[...]                                   # (TN, D) streamed weight tile
    x = x_ref[...].astype(w.dtype)                   # (B, D) resident input

    # MXU matmul contracting the last (lane) dim of both operands -- no weight
    # relayout in VMEM, f32 accumulation.
    dots = jax.lax.dot_general(
        x, w, (((1,), (1,)), ((), ())),
        preferred_element_type=jnp.float32)          # (B, TN) f32

    # Row scale (scale/||x||, precomputed) * column scale (1/||w||, precomputed).
    cos_s = dots * invx_ref[...] * invw_ref[...]     # s * cos(theta)

    # One-hot margin subtraction: (1, TN) GLOBAL column ids broadcast against
    # the (B, 1) labels -- avoids a (B, TN) int32 temp.
    col0 = pl.program_id(0) * block_n
    cols = col0 + jax.lax.broadcasted_iota(jnp.int32, (1, block_n), 1)
    is_target = cols == label_ref[...]               # (B, TN) bool

    o_ref[...] = jnp.where(is_target, cos_s - scale * margin,
                           cos_s).astype(o_ref.dtype)


def add_margin_product(x, weight, label, *, scale=32.0, margin=0.2,
                       block_n=None, weight_stream_dtype=None,
                       out_dtype=jnp.float32):
    """AddMarginProduct forward.

    x:      (B, in_features) float32 / bfloat16
    weight: (out_features, in_features) float32 / bfloat16
    label:  (B,) integer class indices
    weight_stream_dtype: optional dtype for the streamed weight tiles
        (e.g. jnp.bfloat16 halves the dominant HBM stream; norms stay f32).
    out_dtype: output dtype (bf16 trims writeback traffic for large B).
    returns (B, out_features) array of out_dtype
    """
    B, D = x.shape
    N, D2 = weight.shape
    assert D == D2

    w_dtype = (jnp.dtype(weight_stream_dtype) if weight_stream_dtype is not None
               else jnp.dtype(weight.dtype))
    w_item = w_dtype.itemsize
    out_item = jnp.dtype(out_dtype).itemsize
    x_item = jnp.dtype(x.dtype).itemsize

    # ---- generation-aware VMEM budget ----------------------------------------
    try:
        vmem_cap = int(pltpu.get_tpu_info().vmem_capacity_bytes)
    except Exception:
        vmem_cap = 64 * 2**20                 # conservative (v7x-like) fallback
    if vmem_cap >= 100 * 2**20:               # v5e / v6e class: 128 MiB physical
        vmem_cap_limit = 96 * 2**20
        buf_w = 3                             # extra in-flight weight DMA
    else:                                     # v7x class: 64 MiB per TensorCore
        vmem_cap_limit = 48 * 2**20
        buf_w = 2

    n_ceil = pl.cdiv(N, 128) * 128
    headroom = 4 * 2**20
    resident = B * D * x_item + 2 * B * 4     # x + labels + scale/||x|| (tiny)
    # Per class-column VMEM cost: streamed weight buffers, double-buffered
    # output + inv_w tiles, plus the (B, TN) f32 dots/cos_s intermediates.
    per_class = buf_w * D * w_item + 2 * B * out_item + 2 * 4 + 2 * B * 4

    if block_n is None:
        avail = max(per_class * 128, vmem_cap_limit - headroom - resident)
        block_n = max(128, (avail // per_class) // 128 * 128)
        block_n = min(block_n, n_ceil)
        # Guarantee >= 2 class tiles so the "parallel" grid axis actually splits
        # across v7x's two TensorCores (harmless extra step on v5e/v6e).
        if n_ceil >= 256:
            block_n = min(block_n, (n_ceil // 2) // 128 * 128)
    block_n = int(max(128, min(block_n, n_ceil)))
    n_pad = pl.cdiv(N, block_n) * block_n
    grid_n = n_pad // block_n
    buf_w = min(buf_w, max(2, grid_n))        # no point buffering past the grid

    # ---- host-side prep -------------------------------------------------------
    w_pad = weight if n_pad == N else jnp.pad(weight, ((0, n_pad - N), (0, 0)))
    if w_pad.dtype != w_dtype:
        w_pad = w_pad.astype(w_dtype)         # stream weights at reduced width

    # Per-class 1/||w|| from the full-precision weights (f32 throughout).
    w_sq = jnp.sum(weight.astype(jnp.float32) ** 2, axis=-1)
    inv_w = jax.lax.rsqrt(jnp.maximum(w_sq, 1e-24))
    if n_pad != N:
        inv_w = jnp.pad(inv_w, (0, n_pad - N), constant_values=1.0)
    inv_w = inv_w.reshape(1, n_pad).astype(jnp.float32)

    # Per-row scale/||x|| (F.normalize eps semantics), hoisted out of the kernel.
    x_sq = jnp.sum(x.astype(jnp.float32) ** 2, axis=-1, keepdims=True)
    inv_x = (jax.lax.rsqrt(jnp.maximum(x_sq, 1e-24)) * float(scale)
             ).astype(jnp.float32)

    label2d = label.reshape(B, 1).astype(jnp.int32)

    kernel = functools.partial(_add_margin_kernel, scale=float(scale),
                               margin=float(margin), block_n=block_n)

    # VMEM estimate including in-kernel f32 intermediates + headroom.
    est = resident + per_class * block_n + headroom
    vmem_limit = int(min(vmem_cap_limit, max(16 * 2**20, est)))

    # Weight tile spec; deeper pipelining on v5e/v6e where VMEM allows it.
    w_spec = pl.BlockSpec((block_n, D), lambda j: (j, 0))
    if buf_w > 2:
        try:
            w_spec = pl.BlockSpec((block_n, D), lambda j: (j, 0),
                                  pipeline_mode=pl.Buffered(buf_w))
        except TypeError:
            pass  # older jax: fall back to default double buffering

    cost = pl.CostEstimate(
        flops=2 * B * n_pad * D,
        transcendentals=0,
        bytes_accessed=(n_pad * D * w_item + B * n_pad * out_item
                        + B * D * x_item + n_pad * 4 + B * 8))

    out = pl.pallas_call(
        kernel,
        out_shape=jax.ShapeDtypeStruct((B, n_pad), out_dtype),
        grid=(grid_n,),
        in_specs=[
            pl.BlockSpec((B, D), lambda j: (0, 0)),         # x (resident)
            w_spec,                                         # weight tile (stream)
            pl.BlockSpec((1, block_n), lambda j: (0, j)),   # 1/||w|| tile
            pl.BlockSpec((B, 1), lambda j: (0, 0)),         # scale/||x|| (resident)
            pl.BlockSpec((B, 1), lambda j: (0, 0)),         # labels (resident)
        ],
        out_specs=pl.BlockSpec((B, block_n), lambda j: (0, j)),
        compiler_params=pltpu.CompilerParams(
            dimension_semantics=("parallel",),
            vmem_limit_bytes=vmem_limit),
        cost_estimate=cost,
    )(x, w_pad, inv_w, inv_x, label2d)

    return out if n_pad == N else out[:, :N]


if __name__ == "__main__":
    # Small, deterministic problem: batch=8, in_features=32, out_features=16
    B, IN_F, OUT_F = 8, 32, 16
    SCALE, MARGIN = 32.0, 0.2

    key = jax.random.PRNGKey(0)
    kx, kw, kl = jax.random.split(key, 3)

    x = jax.random.normal(kx, (B, IN_F), dtype=jnp.float32)

    # nn.init.xavier_uniform_ on weight of shape (out_features, in_features)
    bound = math.sqrt(6.0 / (IN_F + OUT_F))
    weight = jax.random.uniform(
        kw, (OUT_F, IN_F), dtype=jnp.float32, minval=-bound, maxval=bound)

    label = jax.random.randint(kl, (B,), 0, OUT_F, dtype=jnp.int32)

    # Reference in plain JAX (same semantics as the PyTorch module).
    xn = x / jnp.maximum(jnp.linalg.norm(x, axis=-1, keepdims=True), 1e-12)
    wn = weight / jnp.maximum(
        jnp.linalg.norm(weight, axis=-1, keepdims=True), 1e-12)
    cos = xn @ wn.T
    one_hot = jax.nn.one_hot(label, OUT_F, dtype=jnp.float32)
    ref = (one_hot * (cos - MARGIN) + (1.0 - one_hot) * cos) * SCALE

    # 1) full-precision path: exact match to the reference.
    out = add_margin_product(x, weight, label, scale=SCALE, margin=MARGIN)
    out = jax.block_until_ready(out)
    assert out.shape == (B, OUT_F)
    assert out.dtype == jnp.float32
    assert jnp.allclose(out, ref, atol=1e-4, rtol=1e-4), "f32 mismatch vs reference"

    # 2) bandwidth-optimized path: bf16 weight stream + bf16 output.
    out_bf = add_margin_product(x, weight, label, scale=SCALE, margin=MARGIN,
                                weight_stream_dtype=jnp.bfloat16,
                                out_dtype=jnp.bfloat16)
    out_bf = jax.block_until_ready(out_bf)
    assert out_bf.shape == (B, OUT_F)
    assert out_bf.dtype == jnp.bfloat16
    assert jnp.allclose(out_bf.astype(jnp.float32), ref, atol=0.3, rtol=3e-2), \
        "bf16 mismatch vs reference"

    print("KERNEL_OK")
</pallas_src>

<mosaic_0001>
module attributes {stable_mosaic.version = 11 : i64} {
  func.func @_add_margin_kernel(%arg0: i32, %arg1: memref<8x32xf32, #tpu.memory_space<vmem>>, %arg2: memref<128x32xf32, #tpu.memory_space<vmem>>, %arg3: memref<1x128xf32, #tpu.memory_space<vmem>>, %arg4: memref<8x1xf32, #tpu.memory_space<vmem>>, %arg5: memref<8x1xi32, #tpu.memory_space<vmem>>, %arg6: memref<8x128xf32, #tpu.memory_space<vmem>>) attributes {dimension_semantics = [#tpu.dimension_semantics<parallel>], iteration_bounds = array<i64: 1>, scalar_prefetch = 0 : i64, scratch_operands = 0 : i64, tpu.core_type = #tpu.core_type<tc>, window_params = [{pipeline_mode = #tpu.pipeline_mode<synchronous>, transform_indices = @transform_0, window_bounds = array<i64: 8, 32>}, {transform_indices = @transform_1, window_bounds = array<i64: 128, 32>}, {transform_indices = @transform_2, window_bounds = array<i64: 1, 128>}, {pipeline_mode = #tpu.pipeline_mode<synchronous>, transform_indices = @transform_3, window_bounds = array<i64: 8, 1>}, {pipeline_mode = #tpu.pipeline_mode<synchronous>, transform_indices = @transform_4, window_bounds = array<i64: 8, 1>}, {transform_indices = @transform_5, window_bounds = array<i64: 8, 128>}]} {
    %c0 = arith.constant 0 : index
    %c0_0 = arith.constant 0 : index
    %0 = vector.load %arg2[%c0, %c0_0] : memref<128x32xf32, #tpu.memory_space<vmem>>, vector<128x32xf32>
    %c0_1 = arith.constant 0 : index
    %c0_2 = arith.constant 0 : index
    %1 = vector.load %arg1[%c0_1, %c0_2] : memref<8x32xf32, #tpu.memory_space<vmem>>, vector<8x32xf32>
    %cst = arith.constant dense<0.000000e+00> : vector<8x128xf32>
    %2 = tpu.matmul %1, %0, %cst {dimension_numbers = #tpu.dot_dimension_numbers<[1], [1], [0], [0], [0, 0, 1, 0], [], []>} : vector<8x32xf32>, vector<128x32xf32>, vector<8x128xf32> -> vector<8x128xf32>
    %c0_3 = arith.constant 0 : index
    %c0_4 = arith.constant 0 : index
    %3 = vector.load %arg4[%c0_3, %c0_4] : memref<8x1xf32, #tpu.memory_space<vmem>>, vector<8x1xf32>
    %4 = vector.broadcast %3 : vector<8x1xf32> to vector<8x128xf32>
    %5 = arith.mulf %2, %4 : vector<8x128xf32>
    %c0_5 = arith.constant 0 : index
    %c0_6 = arith.constant 0 : index
    %6 = vector.load %arg3[%c0_5, %c0_6] : memref<1x128xf32, #tpu.memory_space<vmem>>, vector<1x128xf32>
    %7 = vector.broadcast %6 : vector<1x128xf32> to vector<8x128xf32>
    %8 = arith.mulf %5, %7 : vector<8x128xf32>
    %c128_i32 = arith.constant 128 : i32
    %9 = arith.muli %arg0, %c128_i32 : i32
    %10 = tpu.iota {dimensions = array<i32: 1>} : vector<1x128xi32>
    %11 = vector.broadcast %9 : i32 to vector<1x128xi32>
    %12 = arith.addi %11, %10 : vector<1x128xi32>
    %c0_7 = arith.constant 0 : index
    %c0_8 = arith.constant 0 : index
    %13 = vector.load %arg5[%c0_7, %c0_8] : memref<8x1xi32, #tpu.memory_space<vmem>>, vector<8x1xi32>
    %14 = vector.broadcast %12 : vector<1x128xi32> to vector<8x128xi32>
    %15 = vector.broadcast %13 : vector<8x1xi32> to vector<8x128xi32>
    %16 = arith.cmpi eq, %14, %15 : vector<8x128xi32>
    %cst_9 = arith.constant 6.400000e+00 : f32
    %17 = vector.broadcast %cst_9 : f32 to vector<8x128xf32>
    %18 = arith.subf %8, %17 : vector<8x128xf32>
    %19 = arith.select %16, %18, %8 : vector<8x128xi1>, vector<8x128xf32>
    %c0_10 = arith.constant 0 : index
    %c0_11 = arith.constant 0 : index
    %20 = vector.load %arg6[%c0_10, %c0_11] : memref<8x128xf32, #tpu.memory_space<vmem>>, vector<8x128xf32>
    tpu.vector_store %arg6[%c0_10, %c0_11], %19 {strides = array<i32>} : memref<8x128xf32, #tpu.memory_space<vmem>>, vector<8x128xf32>,
    return
  }
  func.func @transform_0(%arg0: i32) -> (i32, i32) {
    %c0_i32 = arith.constant 0 : i32
    %c0_i32_0 = arith.constant 0 : i32
    %c0_i32_1 = arith.constant 0 : i32
    return %c0_i32, %c0_i32_0 : i32, i32
  }
  func.func @transform_1(%arg0: i32) -> (i32, i32) {
    %c0_i32 = arith.constant 0 : i32
    %c0_i32_0 = arith.constant 0 : i32
    return %arg0, %c0_i32 : i32, i32
  }
  func.func @transform_2(%arg0: i32) -> (i32, i32) {
    %c0_i32 = arith.constant 0 : i32
    %c0_i32_0 = arith.constant 0 : i32
    return %c0_i32, %arg0 : i32, i32
  }
  func.func @transform_3(%arg0: i32) -> (i32, i32) {
    %c0_i32 = arith.constant 0 : i32
    %c0_i32_0 = arith.constant 0 : i32
    %c0_i32_1 = arith.constant 0 : i32
    return %c0_i32, %c0_i32_0 : i32, i32
  }
  func.func @transform_4(%arg0: i32) -> (i32, i32) {
    %c0_i32 = arith.constant 0 : i32
    %c0_i32_0 = arith.constant 0 : i32
    %c0_i32_1 = arith.constant 0 : i32
    return %c0_i32, %c0_i32_0 : i32, i32
  }
  func.func @transform_5(%arg0: i32) -> (i32, i32) {
    %c0_i32 = arith.constant 0 : i32
    %c0_i32_0 = arith.constant 0 : i32
    return %c0_i32, %arg0 : i32, i32
  }
}

</mosaic_0001>

<llo_original>
// kernel: tpu_custom_call.1
$region0: #{tpu_custom_call.1}
  #allocation0 [shape = 'u32[]', space=smem, size = 0x4, offset = 0x4, fixed_abs, tag = 'smem constant byte address 0x4 - core index']
  #allocation1 [shape = 'u32[144,128]{1,0:T(1,128)}', space=vmem, size = 0x12000, scoped, tag = 'internal scratch']
  %s0 = inlined_call_operand.vmem [shape: f32[8,32], index: 0, kind: input, shape index: {}]
  %s1 = inlined_call_operand.vmem [shape: f32[128,32], index: 1, kind: input, shape index: {}]
  %s2 = inlined_call_operand.vmem [shape: f32[1,128], index: 2, kind: input, shape index: {}]
  %s3 = inlined_call_operand.vmem [shape: f32[8,1], index: 3, kind: input, shape index: {}]
  %s4 = inlined_call_operand.vmem [shape: s32[8,1], index: 4, kind: input, shape index: {}]
  %s5 = inlined_call_operand.hbm [shape: f32[8,128], index: 5, kind: output, shape index: {}]
  %s6 = sld [smem:[#allocation0]]
  $region30: #{tpu_custom_call.1} parent=0
    _
  %s8 = ssub.s32 1, %s6
  %s9 = scalar_select 0, %s8, %s6
  $region1: #{tpu_custom_call.1} parent=0
    #allocation2 [shape = 'u8[4096]{0}', space=vmem, size = 0x1000, scoped, tag = 'output window, operand 0, single buffered']
    #allocation3 [shape = 's32[1]{0}', space=sflag, size = 0x4, scoped, tag = 'scoped memory for tpu_custom_call.1']
    %10 = vsyncpa [#allocation3], 0
    // Predicated region
    $region2: #{tpu_custom_call.1} parent=1 // pred_check
      _
    $region3: #{tpu_custom_call.1} parent=1 // pred_check_branch
      %12 = sbr.rel (0) target = $region5
    $region4: #{tpu_custom_call.1} parent=1 // pred_region
      _
    $region5: #{tpu_custom_call.1} parent=1 // pred_fallthru
      _
    // Predicated region
    $region6: #{tpu_custom_call.1} parent=1 // pred_check
      _
    $region7: #{tpu_custom_call.1} parent=1 // pred_check_branch
      %14 = sbr.rel (0) target = $region9
    $region8: #{tpu_custom_call.1} parent=1 // pred_region
      _
    $region9: #{tpu_custom_call.1} parent=1 // pred_fallthru
      _
    // Predicated region
    $region10: #{tpu_custom_call.1} parent=1 // pred_check
      _
    $region11: #{tpu_custom_call.1} parent=1 // pred_check_branch
      %16 = sbr.rel (0) target = $region13
    $region12: #{tpu_custom_call.1} parent=1 // pred_region
      _
    $region13: #{tpu_custom_call.1} parent=1 // pred_fallthru
      _
    // Predicated region
    $region14: #{tpu_custom_call.1} parent=1 // pred_check
      _
    $region15: #{tpu_custom_call.1} parent=1 // pred_check_branch
      %18 = sbr.rel (0) target = $region17
    $region16: #{tpu_custom_call.1} parent=1 // pred_region
      _
    $region17: #{tpu_custom_call.1} parent=1 // pred_fallthru
      _
    // Predicated region
    $region18: #{tpu_custom_call.1} parent=1 // pred_check
      _
    $region19: #{tpu_custom_call.1} parent=1 // pred_check_branch
      %20 = sbr.rel (0) target = $region21
    $region20: #{tpu_custom_call.1} parent=1 // pred_region
      _
    $region21: #{tpu_custom_call.1} parent=1 // pred_fallthru
      _
    %v21 = vld [vmem:[%s1] sm:$0xff]
    %v22 = vld [vmem:[%s1 + $0x8] sm:$0xff]
    %v23 = vld [vmem:[%s1 + $0x10] sm:$0xff]
    %v24 = vld [vmem:[%s1 + $0x18] sm:$0xff]
    %v25 = vld [vmem:[%s1 + $0x20] sm:$0xff]
    %v26 = vld [vmem:[%s1 + $0x28] sm:$0xff]
    %v27 = vld [vmem:[%s1 + $0x30] sm:$0xff]
    %v28 = vld [vmem:[%s1 + $0x38] sm:$0xff]
    %v29 = vld [vmem:[%s1 + $0x40] sm:$0xff]
    %v30 = vld [vmem:[%s1 + $0x48] sm:$0xff]
    %v31 = vld [vmem:[%s1 + $0x50] sm:$0xff]
    %v32 = vld [vmem:[%s1 + $0x58] sm:$0xff]
    %v33 = vld [vmem:[%s1 + $0x60] sm:$0xff]
    %v34 = vld [vmem:[%s1 + $0x68] sm:$0xff]
    %v35 = vld [vmem:[%s1 + $0x70] sm:$0xff]
    %v36 = vld [vmem:[%s1 + $0x78] sm:$0xff]
    %v37 = vld [vmem:[%s0] sm:$0xff]
    %vm38 = vcmask 261120
    %v40 = vsel %vm38, %v37, 0
    %v43 = vsel %vm38, %v21, 0
    %v46 = vsel %vm38, %v22, 0
    %v49 = vsel %vm38, %v23, 0
    %v52 = vsel %vm38, %v24, 0
    %v55 = vsel %vm38, %v25, 0
    %v58 = vsel %vm38, %v26, 0
    %v61 = vsel %vm38, %v27, 0
    %v64 = vsel %vm38, %v28, 0
    %v67 = vsel %vm38, %v29, 0
    %v70 = vsel %vm38, %v30, 0
    %v73 = vsel %vm38, %v31, 0
    %v76 = vsel %vm38, %v32, 0
    %v79 = vsel %vm38, %v33, 0
    %v82 = vsel %vm38, %v34, 0
    %v85 = vsel %vm38, %v35, 0
    %v88 = vsel %vm38, %v36, 0
    %90 = vmatprep.subr.mxu0 0.0
    %91 = vmatpush1.xpose.msra.mxu0 %v88
    %92 = vmatprep.subr.mxu0 0.0
    %93 = vmatpush1.xpose.msra.mxu0 %v85
    %94 = vmatprep.subr.mxu0 0.0
    %95 = vmatpush1.xpose.msra.mxu0 %v82
    %96 = vmatprep.subr.mxu0 0.0
    %97 = vmatpush1.xpose.msra.mxu0 %v79
    %98 = vmatprep.subr.mxu0 0.0
    %99 = vmatpush1.xpose.msra.mxu0 %v76
    %100 = vmatprep.subr.mxu0 0.0
    %101 = vmatpush1.xpose.msra.mxu0 %v73
    %102 = vmatprep.subr.mxu0 0.0
    %103 = vmatpush1.xpose.msra.mxu0 %v70
    %104 = vmatprep.subr.mxu0 0.0
    %105 = vmatpush1.xpose.msra.mxu0 %v67
    %106 = vmatprep.subr.mxu0 0.0
    %107 = vmatpush1.xpose.msra.mxu0 %v64
    %108 = vmatprep.subr.mxu0 0.0
    %109 = vmatpush1.xpose.msra.mxu0 %v61
    %110 = vmatprep.subr.mxu0 0.0
    %111 = vmatpush1.xpose.msra.mxu0 %v58
    %112 = vmatprep.subr.mxu0 0.0
    %113 = vmatpush1.xpose.msra.mxu0 %v55
    %114 = vmatprep.subr.mxu0 0.0
    %115 = vmatpush1.xpose.msra.mxu0 %v52
    %116 = vmatprep.subr.mxu0 0.0
    %117 = vmatpush1.xpose.msra.mxu0 %v49
    %118 = vmatprep.subr.mxu0 0.0
    %119 = vmatpush1.xpose.msra.mxu0 %v46
    %120 = vmatprep.subr.mxu0 0.0
    %121 = vmatpush1.xpose.msra.mxu0 %v43
    %122 = vmatprep.subr.mxu0 0.0
    %123 = vmatpush2.xpose.msra.mxu0 0.0
    %124 = vmatprep.subr.mxu0 0.0
    %125 = vmatpush2.xpose.msra.mxu0 0.0
    %126 = vmatprep.subr.mxu0 0.0
    %127 = vmatpush2.xpose.msra.mxu0 0.0
    %128 = vmatprep.subr.mxu0 0.0
    %129 = vmatpush2.xpose.msra.mxu0 0.0
    %130 = vmatprep.subr.mxu0 0.0
    %131 = vmatpush2.xpose.msra.mxu0 0.0
    %132 = vmatprep.subr.mxu0 0.0
    %133 = vmatpush2.xpose.msra.mxu0 0.0
    %134 = vmatprep.subr.mxu0 0.0
    %135 = vmatpush2.xpose.msra.mxu0 0.0
    %136 = vmatprep.subr.mxu0 0.0
    %137 = vmatpush2.xpose.msra.mxu0 0.0
    %138 = vmatprep.subr.mxu0 0.0
    %139 = vmatpush2.xpose.msra.mxu0 0.0
    %140 = vmatprep.subr.mxu0 0.0
    %141 = vmatpush2.xpose.msra.mxu0 0.0
    %142 = vmatprep.subr.mxu0 0.0
    %143 = vmatpush2.xpose.msra.mxu0 0.0
    %144 = vmatprep.subr.mxu0 0.0
    %145 = vmatpush2.xpose.msra.mxu0 0.0
    %146 = vmatprep.subr.mxu0 0.0
    %147 = vmatpush2.xpose.msra.mxu0 0.0
    %148 = vmatprep.subr.mxu0 0.0
    %149 = vmatpush2.xpose.msra.mxu0 0.0
    %150 = vmatprep.subr.mxu0 0.0
    %151 = vmatpush2.xpose.msra.mxu0 0.0
    %152 = vmatprep.subr.mxu0 0.0
    %153 = vmatpush2.xpose.msra.mxu0 0.0
    %154 = vmatprep.mubr.f32.mxu0 0.0
    %155 = vmatmul.mubr.f32.gmra.mxu0 %v40
    %v156 = vpop.f32.mrf.mxu0
    %v157 = vadd.f32 0.0, %v156
    %v158 = vpop.f32.mrf.mxu0
    %159 = vdwg.mxu0
    %v160 = vld [vmem:[%s3] sm:$0xff]
    %162 = vset.pattern.permute.xlu0 0
    %163 = vperm.xlu0 %162, %v160
    %v164 = vpop.permute.xlu0 %163
    %v166 = vmul.f32 %v157, %v164
    %v167 = vld [vmem:[%s2] sm:$0x1]
    %v169 = vlaneseq
    %v170 = vshrl.u32 %v169, 7
    %v171 = vsub.s32 0, %v170
    %v172 = vrot.slane %v167, %v171
    %v174 = vmul.f32 %v166, %v172
    %s175 = smul.u32 0, 128
    %v176 = vlaneseq
    %v177 = vand.u32 %v176, 127
    %v178 = vstv %s175
    %v179 = vadd.s32 %v178, %v177
    %v180 = vld [vmem:[%s4] sm:$0xff]
    %181 = vset.pattern.permute.xlu0 0
    %182 = vperm.xlu0 %181, %v180
    %v183 = vpop.permute.xlu0 %182
    %vm184 = vcmp.eq.s32.totalorder %v179, %v183
    %v185 = vsub.f32 %v174, 6.4
    %v186 = vsel %vm184, %v185, %v174
    %187 = vst [vmem:[#allocation2] sm:$0xff] %v186
    // Predicated region
    $region22: #{tpu_custom_call.1} parent=1 // pred_check
      _
    $region23: #{tpu_custom_call.1} parent=1 // pred_check_branch
      %189 = sbr.rel (0) target = $region25
    $region24: #{tpu_custom_call.1} parent=1 // pred_region
      %s191 = ssub.s32 128, 128
      %192 = vsyncadd [#allocation3], %s191
      %s194 = sshll.u32 [#allocation2], 4
      %s195 = int_to_ptr.vmem [resolvable:$true] %s194
      %197 = dma.vmem_to_hbm [thread:$0]  %s195, 128, %s5, [#allocation3]
    $region25: #{tpu_custom_call.1} parent=1 // pred_fallthru
      _
    // Predicated region
    $region26: #{tpu_custom_call.1} parent=1 // pred_check
      _
    $region27: #{tpu_custom_call.1} parent=1 // pred_check_branch
      %199 = sbr.rel (0) target = $region29
    $region28: #{tpu_custom_call.1} parent=1 // pred_region
      %200 = dma.done [#allocation3], 128
    $region29: #{tpu_custom_call.1} parent=1 // pred_fallthru
      _
    %201 = vsyncpa [#allocation3], 1

</llo_original>
